<compile_context>
chip_gen: v5e
topology: v5e:2x2
jax: 0.10.0
libtpu: 0.0.40
codegen_flags: <defaults>
</compile_context>

<pallas_src>
import functools

import jax
import jax.numpy as jnp
from jax import lax
from jax.experimental import pallas as pl
from jax.experimental.pallas import tpu as pltpu


def _residual_attention_kernel(x_ref, w_ref, o_ref, sum_ref, max_ref, *, la, hw_total):
    """One grid step: a (BB, C, THW) activation slab against the full (N_pad, C) weight.

    x_ref   : (BB, C, THW)  activations in NC(HW) layout
    w_ref   : (N_pad, C)    1x1-conv weight, zero-padded along the class dim
    o_ref   : (BB, N_pad)   output scores (lane-dense; written on the last spatial step)
    sum_ref : (BB, N_pad)   running spatial sum  (f32 scratch)
    max_ref : (BB, N_pad)   running spatial max  (f32 scratch)
    """
    j = pl.program_id(1)

    @pl.when(j == 0)
    def _init():
        sum_ref[...] = jnp.zeros_like(sum_ref)
        max_ref[...] = jnp.full_like(max_ref, -jnp.inf)

    w = w_ref[...]
    bb = x_ref.shape[0]
    sums = []
    maxs = []
    for b in range(bb):  # static unroll over the batch block (bb <= 8)
        # y = x_b^T @ w^T -> (THW, N_pad): TN matmul on the MXU, no explicit transposes.
        y = lax.dot_general(
            x_ref[b], w,
            dimension_numbers=(((0,), (1,)), ((), ())),
            preferred_element_type=jnp.float32,
        )
        sums.append(jnp.sum(y, axis=0))   # (N_pad,) spatial sum  (sublane reduce)
        maxs.append(jnp.max(y, axis=0))   # (N_pad,) spatial max
    sum_ref[...] = sum_ref[...] + jnp.stack(sums, axis=0)
    max_ref[...] = jnp.maximum(max_ref[...], jnp.stack(maxs, axis=0))

    @pl.when(j == pl.num_programs(1) - 1)
    def _finalize():
        score = sum_ref[...] * (1.0 / hw_total) + la * max_ref[...]
        o_ref[...] = score.astype(o_ref.dtype)


def _pick_spatial_tile(hw, c, bb, itemsize, budget_bytes):
    """Largest spatial tile fitting the VMEM budget; tile must be HW itself or a
    multiple of 128 that divides HW (Pallas last-dim tiling rule)."""
    if bb * c * hw * itemsize <= budget_bytes:
        return hw
    t = (budget_bytes // (bb * c * itemsize)) // 128 * 128
    while t >= 128:
        if hw % t == 0:
            return t
        t -= 128
    return hw  # no legal divisor found; fall back to the full spatial extent


def residual_attention(x_nchw, weight, la=0.2):
    """x_nchw: (B, C, H, W); weight: (num_class, C) = 1x1 conv weight (no bias)."""
    B, C, H, W = x_nchw.shape
    N = weight.shape[0]
    HW = H * W
    N_pad = ((N + 127) // 128) * 128  # lane-dense output / MXU-friendly class dim

    # Free reshape (no transpose, no extra HBM traffic): NCHW -> (B, C, HW).
    x = x_nchw.reshape(B, C, HW)
    w_pad = jnp.pad(weight.astype(x.dtype), ((0, N_pad - N), (0, 0)))

    BB = min(8, B)  # batch rows per grid step -> (BB, 128)-aligned output stores
    itemsize = jnp.dtype(x.dtype).itemsize
    THW = _pick_spatial_tile(HW, C, BB, itemsize, budget_bytes=8 * 1024 * 1024)
    grid = (pl.cdiv(B, BB), HW // THW)

    kernel = functools.partial(
        _residual_attention_kernel, la=float(la), hw_total=float(HW))

    cost = pl.CostEstimate(
        flops=2 * B * HW * C * N_pad,
        transcendentals=0,
        bytes_accessed=x.size * itemsize + w_pad.size * itemsize + B * N_pad * 4,
    )

    out_pad = pl.pallas_call(
        kernel,
        out_shape=jax.ShapeDtypeStruct((B, N_pad), jnp.float32),
        grid_spec=pltpu.PrefetchScalarGridSpec(
            num_scalar_prefetch=0,
            grid=grid,
            in_specs=[
                # (BB, C, THW) activation slab per step.
                pl.BlockSpec((BB, C, THW), lambda i, j: (i, 0, j)),
                # Full (padded) weight, constant block index -> stays resident.
                pl.BlockSpec((N_pad, C), lambda i, j: (0, 0)),
            ],
            out_specs=pl.BlockSpec((BB, N_pad), lambda i, j: (i, 0)),
            scratch_shapes=[
                pltpu.VMEM((BB, N_pad), jnp.float32),  # running sum
                pltpu.VMEM((BB, N_pad), jnp.float32),  # running max
            ],
        ),
        compiler_params=pltpu.CompilerParams(
            dimension_semantics=("parallel", "arbitrary"),
            vmem_limit_bytes=48 * 1024 * 1024,
        ),
        cost_estimate=cost,
    )(x, w_pad)

    return out_pad[:, :N]


if __name__ == "__main__":
    # Small, deterministic shapes consistent with the module's forward.
    B, C, H, W = 8, 32, 8, 8
    NUM_CLASS = 16
    LA = 0.2

    key = jax.random.PRNGKey(0)
    kx, kw = jax.random.split(key)
    x = jax.random.normal(kx, (B, C, H, W), dtype=jnp.float32)
    # Deterministic "conv" weight (kernel_size=1, bias=False) -> shape (num_class, C).
    weight = jax.random.normal(kw, (NUM_CLASS, C), dtype=jnp.float32) * 0.05

    out = residual_attention(x, weight, la=LA)
    out = jax.block_until_ready(out)

    # Reference check in plain JAX (same semantics as the PyTorch module).
    y_raw = jnp.einsum("nc,bchw->bnhw", weight, x).reshape(B, NUM_CLASS, H * W)
    ref = jnp.mean(y_raw, axis=2) + LA * jnp.max(y_raw, axis=2)
    assert out.shape == (B, NUM_CLASS)
    assert jnp.allclose(out, ref, atol=1e-3, rtol=1e-3), "mismatch vs reference"

    print("KERNEL_OK")
</pallas_src>

<mosaic_0001>
module attributes {stable_mosaic.version = 11 : i64} {
  func.func @_residual_attention_kernel(%arg0: i32, %arg1: i32, %arg2: memref<8x32x64xf32, #tpu.memory_space<vmem>>, %arg3: memref<128x32xf32, #tpu.memory_space<vmem>>, %arg4: memref<8x128xf32, #tpu.memory_space<vmem>>, %arg5: memref<8x128xf32, #tpu.memory_space<vmem>>, %arg6: memref<8x128xf32, #tpu.memory_space<vmem>>) attributes {dimension_semantics = [#tpu.dimension_semantics<parallel>, #tpu.dimension_semantics<arbitrary>], iteration_bounds = array<i64: 1, 1>, scalar_prefetch = 0 : i64, scratch_operands = 2 : i64, tpu.core_type = #tpu.core_type<tc>, window_params = [{transform_indices = @transform_0, window_bounds = array<i64: 8, 32, 64>}, {pipeline_mode = #tpu.pipeline_mode<synchronous>, transform_indices = @transform_1, window_bounds = array<i64: 128, 32>}, {transform_indices = @transform_2, window_bounds = array<i64: 8, 128>}]} {
    %c0_i32 = arith.constant 0 : i32
    %0 = arith.cmpi eq, %arg1, %c0_i32 : i32
    %1 = arith.extui %0 : i1 to i32
    %c0_i32_0 = arith.constant 0 : i32
    %2 = arith.cmpi ne, %1, %c0_i32_0 : i32
    scf.if %2 {
      %cst_52 = arith.constant 0.000000e+00 : f32
      %71 = vector.broadcast %cst_52 : f32 to vector<8x128xf32>
      %c0_53 = arith.constant 0 : index
      %c0_54 = arith.constant 0 : index
      %72 = vector.load %arg5[%c0_53, %c0_54] : memref<8x128xf32, #tpu.memory_space<vmem>>, vector<8x128xf32>
      tpu.vector_store %arg5[%c0_53, %c0_54], %71 {strides = array<i32>} : memref<8x128xf32, #tpu.memory_space<vmem>>, vector<8x128xf32>,
      %cst_55 = arith.constant 0xFF800000 : f32
      %73 = vector.broadcast %cst_55 : f32 to vector<8x128xf32>
      %c0_56 = arith.constant 0 : index
      %c0_57 = arith.constant 0 : index
      %74 = vector.load %arg6[%c0_56, %c0_57] : memref<8x128xf32, #tpu.memory_space<vmem>>, vector<8x128xf32>
      tpu.vector_store %arg6[%c0_56, %c0_57], %73 {strides = array<i32>} : memref<8x128xf32, #tpu.memory_space<vmem>>, vector<8x128xf32>,
    } else {
    }
    %c0 = arith.constant 0 : index
    %c0_1 = arith.constant 0 : index
    %3 = vector.load %arg3[%c0, %c0_1] : memref<128x32xf32, #tpu.memory_space<vmem>>, vector<128x32xf32>
    %c0_2 = arith.constant 0 : index
    %c0_3 = arith.constant 0 : index
    %c0_4 = arith.constant 0 : index
    %4 = vector.load %arg2[%c0_2, %c0_3, %c0_4] : memref<8x32x64xf32, #tpu.memory_space<vmem>>, vector<1x32x64xf32>
    %5 = vector.shape_cast %4 : vector<1x32x64xf32> to vector<32x64xf32>
    %cst = arith.constant dense<0.000000e+00> : vector<64x128xf32>
    %6 = tpu.matmul %5, %3, %cst {dimension_numbers = #tpu.dot_dimension_numbers<[0], [1], [1], [0], [0, 1, 1, 0], [], []>} : vector<32x64xf32>, vector<128x32xf32>, vector<64x128xf32> -> vector<64x128xf32>
    %cst_5 = arith.constant dense<0.000000e+00> : vector<128xf32>
    %7 = vector.multi_reduction <add>, %6, %cst_5 [0] : vector<64x128xf32> to vector<128xf32>
    %cst_6 = arith.constant dense<0xFF800000> : vector<128xf32>
    %8 = vector.multi_reduction <maximumf>, %6, %cst_6 [0] : vector<64x128xf32> to vector<128xf32>
    %c1 = arith.constant 1 : index
    %c0_7 = arith.constant 0 : index
    %c0_8 = arith.constant 0 : index
    %9 = vector.load %arg2[%c1, %c0_7, %c0_8] : memref<8x32x64xf32, #tpu.memory_space<vmem>>, vector<1x32x64xf32>
    %10 = vector.shape_cast %9 : vector<1x32x64xf32> to vector<32x64xf32>
    %cst_9 = arith.constant dense<0.000000e+00> : vector<64x128xf32>
    %11 = tpu.matmul %10, %3, %cst_9 {dimension_numbers = #tpu.dot_dimension_numbers<[0], [1], [1], [0], [0, 1, 1, 0], [], []>} : vector<32x64xf32>, vector<128x32xf32>, vector<64x128xf32> -> vector<64x128xf32>
    %cst_10 = arith.constant dense<0.000000e+00> : vector<128xf32>
    %12 = vector.multi_reduction <add>, %11, %cst_10 [0] : vector<64x128xf32> to vector<128xf32>
    %cst_11 = arith.constant dense<0xFF800000> : vector<128xf32>
    %13 = vector.multi_reduction <maximumf>, %11, %cst_11 [0] : vector<64x128xf32> to vector<128xf32>
    %c2 = arith.constant 2 : index
    %c0_12 = arith.constant 0 : index
    %c0_13 = arith.constant 0 : index
    %14 = vector.load %arg2[%c2, %c0_12, %c0_13] : memref<8x32x64xf32, #tpu.memory_space<vmem>>, vector<1x32x64xf32>
    %15 = vector.shape_cast %14 : vector<1x32x64xf32> to vector<32x64xf32>
    %cst_14 = arith.constant dense<0.000000e+00> : vector<64x128xf32>
    %16 = tpu.matmul %15, %3, %cst_14 {dimension_numbers = #tpu.dot_dimension_numbers<[0], [1], [1], [0], [0, 1, 1, 0], [], []>} : vector<32x64xf32>, vector<128x32xf32>, vector<64x128xf32> -> vector<64x128xf32>
    %cst_15 = arith.constant dense<0.000000e+00> : vector<128xf32>
    %17 = vector.multi_reduction <add>, %16, %cst_15 [0] : vector<64x128xf32> to vector<128xf32>
    %cst_16 = arith.constant dense<0xFF800000> : vector<128xf32>
    %18 = vector.multi_reduction <maximumf>, %16, %cst_16 [0] : vector<64x128xf32> to vector<128xf32>
    %c3 = arith.constant 3 : index
    %c0_17 = arith.constant 0 : index
    %c0_18 = arith.constant 0 : index
    %19 = vector.load %arg2[%c3, %c0_17, %c0_18] : memref<8x32x64xf32, #tpu.memory_space<vmem>>, vector<1x32x64xf32>
    %20 = vector.shape_cast %19 : vector<1x32x64xf32> to vector<32x64xf32>
    %cst_19 = arith.constant dense<0.000000e+00> : vector<64x128xf32>
    %21 = tpu.matmul %20, %3, %cst_19 {dimension_numbers = #tpu.dot_dimension_numbers<[0], [1], [1], [0], [0, 1, 1, 0], [], []>} : vector<32x64xf32>, vector<128x32xf32>, vector<64x128xf32> -> vector<64x128xf32>
    %cst_20 = arith.constant dense<0.000000e+00> : vector<128xf32>
    %22 = vector.multi_reduction <add>, %21, %cst_20 [0] : vector<64x128xf32> to vector<128xf32>
    %cst_21 = arith.constant dense<0xFF800000> : vector<128xf32>
    %23 = vector.multi_reduction <maximumf>, %21, %cst_21 [0] : vector<64x128xf32> to vector<128xf32>
    %c4 = arith.constant 4 : index
    %c0_22 = arith.constant 0 : index
    %c0_23 = arith.constant 0 : index
    %24 = vector.load %arg2[%c4, %c0_22, %c0_23] : memref<8x32x64xf32, #tpu.memory_space<vmem>>, vector<1x32x64xf32>
    %25 = vector.shape_cast %24 : vector<1x32x64xf32> to vector<32x64xf32>
    %cst_24 = arith.constant dense<0.000000e+00> : vector<64x128xf32>
    %26 = tpu.matmul %25, %3, %cst_24 {dimension_numbers = #tpu.dot_dimension_numbers<[0], [1], [1], [0], [0, 1, 1, 0], [], []>} : vector<32x64xf32>, vector<128x32xf32>, vector<64x128xf32> -> vector<64x128xf32>
    %cst_25 = arith.constant dense<0.000000e+00> : vector<128xf32>
    %27 = vector.multi_reduction <add>, %26, %cst_25 [0] : vector<64x128xf32> to vector<128xf32>
    %cst_26 = arith.constant dense<0xFF800000> : vector<128xf32>
    %28 = vector.multi_reduction <maximumf>, %26, %cst_26 [0] : vector<64x128xf32> to vector<128xf32>
    %c5 = arith.constant 5 : index
    %c0_27 = arith.constant 0 : index
    %c0_28 = arith.constant 0 : index
    %29 = vector.load %arg2[%c5, %c0_27, %c0_28] : memref<8x32x64xf32, #tpu.memory_space<vmem>>, vector<1x32x64xf32>
    %30 = vector.shape_cast %29 : vector<1x32x64xf32> to vector<32x64xf32>
    %cst_29 = arith.constant dense<0.000000e+00> : vector<64x128xf32>
    %31 = tpu.matmul %30, %3, %cst_29 {dimension_numbers = #tpu.dot_dimension_numbers<[0], [1], [1], [0], [0, 1, 1, 0], [], []>} : vector<32x64xf32>, vector<128x32xf32>, vector<64x128xf32> -> vector<64x128xf32>
    %cst_30 = arith.constant dense<0.000000e+00> : vector<128xf32>
    %32 = vector.multi_reduction <add>, %31, %cst_30 [0] : vector<64x128xf32> to vector<128xf32>
    %cst_31 = arith.constant dense<0xFF800000> : vector<128xf32>
    %33 = vector.multi_reduction <maximumf>, %31, %cst_31 [0] : vector<64x128xf32> to vector<128xf32>
    %c6 = arith.constant 6 : index
    %c0_32 = arith.constant 0 : index
    %c0_33 = arith.constant 0 : index
    %34 = vector.load %arg2[%c6, %c0_32, %c0_33] : memref<8x32x64xf32, #tpu.memory_space<vmem>>, vector<1x32x64xf32>
    %35 = vector.shape_cast %34 : vector<1x32x64xf32> to vector<32x64xf32>
    %cst_34 = arith.constant dense<0.000000e+00> : vector<64x128xf32>
    %36 = tpu.matmul %35, %3, %cst_34 {dimension_numbers = #tpu.dot_dimension_numbers<[0], [1], [1], [0], [0, 1, 1, 0], [], []>} : vector<32x64xf32>, vector<128x32xf32>, vector<64x128xf32> -> vector<64x128xf32>
    %cst_35 = arith.constant dense<0.000000e+00> : vector<128xf32>
    %37 = vector.multi_reduction <add>, %36, %cst_35 [0] : vector<64x128xf32> to vector<128xf32>
    %cst_36 = arith.constant dense<0xFF800000> : vector<128xf32>
    %38 = vector.multi_reduction <maximumf>, %36, %cst_36 [0] : vector<64x128xf32> to vector<128xf32>
    %c7 = arith.constant 7 : index
    %c0_37 = arith.constant 0 : index
    %c0_38 = arith.constant 0 : index
    %39 = vector.load %arg2[%c7, %c0_37, %c0_38] : memref<8x32x64xf32, #tpu.memory_space<vmem>>, vector<1x32x64xf32>
    %40 = vector.shape_cast %39 : vector<1x32x64xf32> to vector<32x64xf32>
    %cst_39 = arith.constant dense<0.000000e+00> : vector<64x128xf32>
    %41 = tpu.matmul %40, %3, %cst_39 {dimension_numbers = #tpu.dot_dimension_numbers<[0], [1], [1], [0], [0, 1, 1, 0], [], []>} : vector<32x64xf32>, vector<128x32xf32>, vector<64x128xf32> -> vector<64x128xf32>
    %cst_40 = arith.constant dense<0.000000e+00> : vector<128xf32>
    %42 = vector.multi_reduction <add>, %41, %cst_40 [0] : vector<64x128xf32> to vector<128xf32>
    %cst_41 = arith.constant dense<0xFF800000> : vector<128xf32>
    %43 = vector.multi_reduction <maximumf>, %41, %cst_41 [0] : vector<64x128xf32> to vector<128xf32>
    %c0_42 = arith.constant 0 : index
    %c0_43 = arith.constant 0 : index
    %44 = vector.load %arg5[%c0_42, %c0_43] : memref<8x128xf32, #tpu.memory_space<vmem>>, vector<8x128xf32>
    %45 = vector.shape_cast %7 : vector<128xf32> to vector<1x128xf32>
    %46 = vector.shape_cast %12 : vector<128xf32> to vector<1x128xf32>
    %47 = vector.shape_cast %17 : vector<128xf32> to vector<1x128xf32>
    %48 = vector.shape_cast %22 : vector<128xf32> to vector<1x128xf32>
    %49 = vector.shape_cast %27 : vector<128xf32> to vector<1x128xf32>
    %50 = vector.shape_cast %32 : vector<128xf32> to vector<1x128xf32>
    %51 = vector.shape_cast %37 : vector<128xf32> to vector<1x128xf32>
    %52 = vector.shape_cast %42 : vector<128xf32> to vector<1x128xf32>
    %53 = tpu.concatenate %45, %46, %47, %48, %49, %50, %51, %52 in 0 : vector<1x128xf32>, vector<1x128xf32>, vector<1x128xf32>, vector<1x128xf32>, vector<1x128xf32>, vector<1x128xf32>, vector<1x128xf32>, vector<1x128xf32> -> vector<8x128xf32>
    %54 = arith.addf %44, %53 : vector<8x128xf32>
    %c0_44 = arith.constant 0 : index
    %c0_45 = arith.constant 0 : index
    %55 = vector.load %arg5[%c0_44, %c0_45] : memref<8x128xf32, #tpu.memory_space<vmem>>, vector<8x128xf32>
    tpu.vector_store %arg5[%c0_44, %c0_45], %54 {strides = array<i32>} : memref<8x128xf32, #tpu.memory_space<vmem>>, vector<8x128xf32>,
    %c0_46 = arith.constant 0 : index
    %c0_47 = arith.constant 0 : index
    %56 = vector.load %arg6[%c0_46, %c0_47] : memref<8x128xf32, #tpu.memory_space<vmem>>, vector<8x128xf32>
    %57 = vector.shape_cast %8 : vector<128xf32> to vector<1x128xf32>
    %58 = vector.shape_cast %13 : vector<128xf32> to vector<1x128xf32>
    %59 = vector.shape_cast %18 : vector<128xf32> to vector<1x128xf32>
    %60 = vector.shape_cast %23 : vector<128xf32> to vector<1x128xf32>
    %61 = vector.shape_cast %28 : vector<128xf32> to vector<1x128xf32>
    %62 = vector.shape_cast %33 : vector<128xf32> to vector<1x128xf32>
    %63 = vector.shape_cast %38 : vector<128xf32> to vector<1x128xf32>
    %64 = vector.shape_cast %43 : vector<128xf32> to vector<1x128xf32>
    %65 = tpu.concatenate %57, %58, %59, %60, %61, %62, %63, %64 in 0 : vector<1x128xf32>, vector<1x128xf32>, vector<1x128xf32>, vector<1x128xf32>, vector<1x128xf32>, vector<1x128xf32>, vector<1x128xf32>, vector<1x128xf32> -> vector<8x128xf32>
    %66 = arith.maximumf %56, %65 : vector<8x128xf32>
    %c0_48 = arith.constant 0 : index
    %c0_49 = arith.constant 0 : index
    %67 = vector.load %arg6[%c0_48, %c0_49] : memref<8x128xf32, #tpu.memory_space<vmem>>, vector<8x128xf32>
    tpu.vector_store %arg6[%c0_48, %c0_49], %66 {strides = array<i32>} : memref<8x128xf32, #tpu.memory_space<vmem>>, vector<8x128xf32>,
    %c0_i32_50 = arith.constant 0 : i32
    %68 = arith.cmpi eq, %arg1, %c0_i32_50 : i32
    %69 = arith.extui %68 : i1 to i32
    %c0_i32_51 = arith.constant 0 : i32
    %70 = arith.cmpi ne, %69, %c0_i32_51 : i32
    scf.if %70 {
      %c0_52 = arith.constant 0 : index
      %c0_53 = arith.constant 0 : index
      %71 = vector.load %arg5[%c0_52, %c0_53] : memref<8x128xf32, #tpu.memory_space<vmem>>, vector<8x128xf32>
      %cst_54 = arith.constant 1.562500e-02 : f32
      %72 = vector.broadcast %cst_54 : f32 to vector<8x128xf32>
      %73 = arith.mulf %71, %72 : vector<8x128xf32>
      %c0_55 = arith.constant 0 : index
      %c0_56 = arith.constant 0 : index
      %74 = vector.load %arg6[%c0_55, %c0_56] : memref<8x128xf32, #tpu.memory_space<vmem>>, vector<8x128xf32>
      %cst_57 = arith.constant 2.000000e-01 : f32
      %75 = vector.broadcast %cst_57 : f32 to vector<8x128xf32>
      %76 = arith.mulf %75, %74 : vector<8x128xf32>
      %77 = arith.addf %73, %76 : vector<8x128xf32>
      %c0_58 = arith.constant 0 : index
      %c0_59 = arith.constant 0 : index
      %78 = vector.load %arg4[%c0_58, %c0_59] : memref<8x128xf32, #tpu.memory_space<vmem>>, vector<8x128xf32>
      tpu.vector_store %arg4[%c0_58, %c0_59], %77 {strides = array<i32>} : memref<8x128xf32, #tpu.memory_space<vmem>>, vector<8x128xf32>,
    } else {
    }
    return
  }
  func.func @transform_0(%arg0: i32, %arg1: i32) -> (i32, i32, i32) {
    %c0_i32 = arith.constant 0 : i32
    %c0_i32_0 = arith.constant 0 : i32
    return %arg0, %c0_i32, %arg1 : i32, i32, i32
  }
  func.func @transform_1(%arg0: i32, %arg1: i32) -> (i32, i32) {
    %c0_i32 = arith.constant 0 : i32
    %c0_i32_0 = arith.constant 0 : i32
    %c0_i32_1 = arith.constant 0 : i32
    return %c0_i32, %c0_i32_0 : i32, i32
  }
  func.func @transform_2(%arg0: i32, %arg1: i32) -> (i32, i32) {
    %c0_i32 = arith.constant 0 : i32
    %c0_i32_0 = arith.constant 0 : i32
    return %arg0, %c0_i32 : i32, i32
  }
}

</mosaic_0001>

<llo_original>
// kernel: tpu_custom_call.1
$region0: #{tpu_custom_call.1}
  #allocation0 [shape = 'u32[]', space=smem, size = 0x4, offset = 0x4, fixed_abs, tag = 'smem constant byte address 0x4 - core index']
  #allocation1 [shape = 'u32[72,128]{1,0:T(1,128)}', space=vmem, size = 0x9000, scoped, tag = 'internal scratch']
  #allocation2 [shape = 'f32[8,128]{1,0:T(8,128)}', space=vmem, size = 0x1000, scoped, tag = 'scratch operand']
  #allocation3 [shape = 'f32[8,128]{1,0:T(8,128)}', space=vmem, size = 0x1000, scoped, tag = 'scratch operand']
  %s0 = inlined_call_operand.hbm [shape: f32[8,32,64], index: 0, kind: input, shape index: {}]
  %s1 = inlined_call_operand.vmem [shape: f32[128,32], index: 1, kind: input, shape index: {}]
  %s2 = inlined_call_operand.hbm [shape: f32[8,128], index: 2, kind: output, shape index: {}]
  %s3 = sld [smem:[#allocation0]]
  $region30: #{tpu_custom_call.1} parent=0
    _
  %s5 = ssub.s32 1, %s3
  %s6 = scalar_select 0, %s5, %s3
  $region1: #{tpu_custom_call.1} parent=0
    #allocation4 [shape = 'u8[131072]{0}', space=vmem, size = 0x20000, scoped, tag = 'input window, operand 0, single buffered']
    #allocation5 [shape = 's32[1]{0}', space=sflag, size = 0x4, scoped, tag = 'scoped memory for tpu_custom_call.1']
    #allocation6 [shape = 's32[1]{0}', space=sflag, size = 0x4, scoped, tag = 'scoped memory for tpu_custom_call.1']
    #allocation7 [shape = 'u8[4096]{0}', space=vmem, size = 0x1000, scoped, tag = 'output window, operand 0, single buffered']
    %7 = vsyncpa [#allocation5], 0
    %8 = vsyncpa [#allocation6], 0
    // Predicated region
    $region2: #{tpu_custom_call.1} parent=1 // pred_check
      _
    $region3: #{tpu_custom_call.1} parent=1 // pred_check_branch
      %10 = sbr.rel (0) target = $region5
    $region4: #{tpu_custom_call.1} parent=1 // pred_region
      %12 = vsyncadd [#allocation5], 0
      %s13 = sshll.u32 %s0, 4
      %s14 = int_to_ptr.hbm [resolvable:$true] %s13
      %s15 = sshll.u32 [#allocation4], 4
      %s16 = int_to_ptr.vmem [resolvable:$true] %s15
      %21 = dma.hbm_to_vmem [thread:$0]  %s14, 4096, %s16, [#allocation5], 128, 128, 8
    $region5: #{tpu_custom_call.1} parent=1 // pred_fallthru
      _
    // Predicated region
    $region6: #{tpu_custom_call.1} parent=1 // pred_check
      _
    $region7: #{tpu_custom_call.1} parent=1 // pred_check_branch
      %23 = sbr.rel (0) target = $region9
    $region8: #{tpu_custom_call.1} parent=1 // pred_region
      _
    $region9: #{tpu_custom_call.1} parent=1 // pred_fallthru
      _
    // Predicated region
    $region10: #{tpu_custom_call.1} parent=1 // pred_check
      _
    $region11: #{tpu_custom_call.1} parent=1 // pred_check_branch
      %25 = sbr.rel (0) target = $region13
    $region12: #{tpu_custom_call.1} parent=1 // pred_region
      %27 = dma.done [#allocation5], 4096
    $region13: #{tpu_custom_call.1} parent=1 // pred_fallthru
      _
    %p28 = scmp.eq.s32.totalorder 0, 0
    // Predicated region
    $region14: #{tpu_custom_call.1} parent=1 // pred_check
      %p29 = pneg %p28
    $region15: #{tpu_custom_call.1} parent=1 // pred_check_branch
      %31 = sbr.rel (%p29) target = $region17
    $region16: #{tpu_custom_call.1} parent=1 // pred_region
      %32 = vst [vmem:[#allocation2] sm:$0xff] 0.0
      %33 = vst [vmem:[#allocation3] sm:$0xff] -inf
    $region17: #{tpu_custom_call.1} parent=1 // pred_fallthru
      _
    %v34 = vld [vmem:[%s1] sm:$0xff]
    %v35 = vld [vmem:[%s1 + $0x8] sm:$0xff]
    %v36 = vld [vmem:[%s1 + $0x10] sm:$0xff]
    %v37 = vld [vmem:[%s1 + $0x18] sm:$0xff]
    %v38 = vld [vmem:[%s1 + $0x20] sm:$0xff]
    %v39 = vld [vmem:[%s1 + $0x28] sm:$0xff]
    %v40 = vld [vmem:[%s1 + $0x30] sm:$0xff]
    %v41 = vld [vmem:[%s1 + $0x38] sm:$0xff]
    %v42 = vld [vmem:[%s1 + $0x40] sm:$0xff]
    %v43 = vld [vmem:[%s1 + $0x48] sm:$0xff]
    %v44 = vld [vmem:[%s1 + $0x50] sm:$0xff]
    %v45 = vld [vmem:[%s1 + $0x58] sm:$0xff]
    %v46 = vld [vmem:[%s1 + $0x60] sm:$0xff]
    %v47 = vld [vmem:[%s1 + $0x68] sm:$0xff]
    %v48 = vld [vmem:[%s1 + $0x70] sm:$0xff]
    %v49 = vld [vmem:[%s1 + $0x78] sm:$0xff]
    %v50 = vld [vmem:[#allocation4] sm:$0xff]
    %v51 = vld [vmem:[#allocation4 + $0x8] sm:$0xff]
    %v52 = vld [vmem:[#allocation4 + $0x10] sm:$0xff]
    %v53 = vld [vmem:[#allocation4 + $0x18] sm:$0xff]
    %54 = vxpose.xlu0.b32.start [1/16] %v50, 128
    %55 = vxpose.xlu0.b32.cont [2/16] %v51, 128
    %56 = vxpose.xlu0.b32.cont [3/16] %v52, 128
    %57 = vxpose.xlu0.b32.cont [4/16] %v53, 128
    %58 = vxpose.xlu0.b32.cont [5/16] 0.0, 128
    %59 = vxpose.xlu0.b32.cont [6/16] 0.0, 128
    %60 = vxpose.xlu0.b32.cont [7/16] 0.0, 128
    %61 = vxpose.xlu0.b32.cont [8/16] 0.0, 128
    %62 = vxpose.xlu0.b32.cont [9/16] 0.0, 128
    %63 = vxpose.xlu0.b32.cont [10/16] 0.0, 128
    %64 = vxpose.xlu0.b32.cont [11/16] 0.0, 128
    %65 = vxpose.xlu0.b32.cont [12/16] 0.0, 128
    %66 = vxpose.xlu0.b32.cont [13/16] 0.0, 128
    %67 = vxpose.xlu0.b32.cont [14/16] 0.0, 128
    %68 = vxpose.xlu0.b32.cont [15/16] 0.0, 128
    %69 = vxpose.xlu0.b32.end [16/16] 0.0, 128
    %v70 = vpop.trf.xlu0
    %v71 = vpop.trf.xlu0
    %v72 = vpop.trf.xlu0
    %v73 = vpop.trf.xlu0
    %v74 = vpop.trf.xlu0
    %v75 = vpop.trf.xlu0
    %v76 = vpop.trf.xlu0
    %v77 = vpop.trf.xlu0
    %v78 = vpop.trf.xlu0
    %v79 = vpop.trf.xlu0
    %v80 = vpop.trf.xlu0
    %v81 = vpop.trf.xlu0
    %v82 = vpop.trf.xlu0
    %v83 = vpop.trf.xlu0
    %v84 = vpop.trf.xlu0
    %v85 = vpop.trf.xlu0
    %vm86 = vcmask 261120
    %v88 = vsel %vm86, %v70, 0
    %v91 = vsel %vm86, %v71, 0
    %v94 = vsel %vm86, %v72, 0
    %v97 = vsel %vm86, %v73, 0
    %v100 = vsel %vm86, %v74, 0
    %v103 = vsel %vm86, %v75, 0
    %v106 = vsel %vm86, %v76, 0
    %v109 = vsel %vm86, %v77, 0
    %v112 = vsel %vm86, %v34, 0
    %v115 = vsel %vm86, %v35, 0
    %v118 = vsel %vm86, %v36, 0
    %v121 = vsel %vm86, %v37, 0
    %v124 = vsel %vm86, %v38, 0
    %v127 = vsel %vm86, %v39, 0
    %v130 = vsel %vm86, %v40, 0
    %v133 = vsel %vm86, %v41, 0
    %v136 = vsel %vm86, %v42, 0
    %v139 = vsel %vm86, %v43, 0
    %v142 = vsel %vm86, %v44, 0
    %v145 = vsel %vm86, %v45, 0
    %v148 = vsel %vm86, %v46, 0
    %v151 = vsel %vm86, %v47, 0
    %v154 = vsel %vm86, %v48, 0
    %v157 = vsel %vm86, %v49, 0
    %159 = vmatpush.xpose.msra.mxu0 %v157
    %160 = vmatpush.xpose.msra.mxu0 %v154
    %161 = vmatpush.xpose.msra.mxu0 %v151
    %162 = vmatpush.xpose.msra.mxu0 %v148
    %163 = vmatpush.xpose.msra.mxu0 %v145
    %164 = vmatpush.xpose.msra.mxu0 %v142
    %165 = vmatpush.xpose.msra.mxu0 %v139
    %166 = vmatpush.xpose.msra.mxu0 %v136
    %167 = vmatpush.xpose.msra.mxu0 %v133
    %168 = vmatpush.xpose.msra.mxu0 %v130
    %169 = vmatpush.xpose.msra.mxu0 %v127
    %170 = vmatpush.xpose.msra.mxu0 %v124
    %171 = vmatpush.xpose.msra.mxu0 %v121
    %172 = vmatpush.xpose.msra.mxu0 %v118
    %173 = vmatpush.xpose.msra.mxu0 %v115
    %174 = vmatpush.xpose.msra.mxu0 %v112
    %175 = vmatmul.f32.gmra.mxu0 %v88
    %v176 = vpop.f32.mrf.mxu0
    %v177 = vadd.f32 0.0, %v176
    %178 = vmatmul.f32.gmra.mxu0 %v91
    %v179 = vpop.f32.mrf.mxu0
    %v180 = vadd.f32 0.0, %v179
    %181 = vmatmul.f32.gmra.mxu0 %v94
    %v182 = vpop.f32.mrf.mxu0
    %v183 = vadd.f32 0.0, %v182
    %184 = vmatmul.f32.gmra.mxu0 %v97
    %v185 = vpop.f32.mrf.mxu0
    %v186 = vadd.f32 0.0, %v185
    %187 = vmatmul.f32.gmra.mxu0 %v100
    %v188 = vpop.f32.mrf.mxu0
    %v189 = vadd.f32 0.0, %v188
    %190 = vmatmul.f32.gmra.mxu0 %v103
    %v191 = vpop.f32.mrf.mxu0
    %v192 = vadd.f32 0.0, %v191
    %193 = vmatmul.f32.gmra.mxu0 %v106
    %v194 = vpop.f32.mrf.mxu0
    %v195 = vadd.f32 0.0, %v194
    %196 = vmatmul.f32.gmra.mxu0 %v109
    %v197 = vpop.f32.mrf.mxu0
    %v198 = vadd.f32 0.0, %v197
    %199 = vdwg.mxu0
    %v200 = vadd.f32 %v177, %v180
    %v201 = vadd.f32 %v200, %v183
    %v202 = vadd.f32 %v201, %v186
    %v203 = vadd.f32 %v202, %v189
    %v204 = vadd.f32 %v203, %v192
    %v205 = vadd.f32 %v204, %v195
    %v206 = vadd.f32 %v205, %v198
    %v207 = vrot.slane %v206, 4
    %v208 = vadd.f32 %v206, %v207
    %v209 = vrot.slane %v208, 2
    %v210 = vadd.f32 %v208, %v209
    %v211 = vrot.slane %v210, 1
    %v212 = vadd.f32 %v210, %v211
    %v213 = vmax.f32 %v177, %v189
    %v214 = vmax.f32 %v180, %v192
    %v215 = vmax.f32 %v183, %v195
    %v216 = vmax.f32 %v186, %v198
    %v217 = vmax.f32 %v213, %v214
    %v218 = vmax.f32 %v215, %v216
    %v219 = vmax.f32 %v217, %v218
    %v220 = vrot.slane %v219, 4
    %v221 = vmax.f32 %v219, %v220
    %v222 = vrot.slane %v221, 2
    %v223 = vmax.f32 %v221, %v222
    %v224 = vrot.slane %v223, 1
    %v225 = vmax.f32 %v223, %v224
    %s226 = scalar_lea.vmem [#allocation4], 32
    %v227 = vld [vmem:[%s226] sm:$0xff]
    %v228 = vld [vmem:[%s226 + $0x8] sm:$0xff]
    %v229 = vld [vmem:[%s226 + $0x10] sm:$0xff]
    %v230 = vld [vmem:[%s226 + $0x18] sm:$0xff]
    %231 = vxpose.xlu0.b32.start [1/16] %v227, 128
    %232 = vxpose.xlu0.b32.cont [2/16] %v228, 128
    %233 = vxpose.xlu0.b32.cont [3/16] %v229, 128
    %234 = vxpose.xlu0.b32.cont [4/16] %v230, 128
    %235 = vxpose.xlu0.b32.cont [5/16] 0.0, 128
    %236 = vxpose.xlu0.b32.cont [6/16] 0.0, 128
    %237 = vxpose.xlu0.b32.cont [7/16] 0.0, 128
    %238 = vxpose.xlu0.b32.cont [8/16] 0.0, 128
    %239 = vxpose.xlu0.b32.cont [9/16] 0.0, 128
    %240 = vxpose.xlu0.b32.cont [10/16] 0.0, 128
    %241 = vxpose.xlu0.b32.cont [11/16] 0.0, 128
    %242 = vxpose.xlu0.b32.cont [12/16] 0.0, 128
    %243 = vxpose.xlu0.b32.cont [13/16] 0.0, 128
    %244 = vxpose.xlu0.b32.cont [14/16] 0.0, 128
    %245 = vxpose.xlu0.b32.cont [15/16] 0.0, 128
    %246 = vxpose.xlu0.b32.end [16/16] 0.0, 128
    %v247 = vpop.trf.xlu0
    %v248 = vpop.trf.xlu0
    %v249 = vpop.trf.xlu0
    %v250 = vpop.trf.xlu0
    %v251 = vpop.trf.xlu0
    %v252 = vpop.trf.xlu0
    %v253 = vpop.trf.xlu0
    %v254 = vpop.trf.xlu0
    %v255 = vpop.trf.xlu0
    %v256 = vpop.trf.xlu0
    %v257 = vpop.trf.xlu0
    %v258 = vpop.trf.xlu0
    %v259 = vpop.trf.xlu0
    %v260 = vpop.trf.xlu0
    %v261 = vpop.trf.xlu0
    %v262 = vpop.trf.xlu0
    %v264 = vsel %vm86, %v247, 0
    %v267 = vsel %vm86, %v248, 0
    %v270 = vsel %vm86, %v249, 0
    %v273 = vsel %vm86, %v250, 0
    %v276 = vsel %vm86, %v251, 0
    %v279 = vsel %vm86, %v252, 0
    %v282 = vsel %vm86, %v253, 0
    %v285 = vsel %vm86, %v254, 0
    %287 = vmatpush.xpose.msra.mxu0 %v157
    %288 = vmatpush.xpose.msra.mxu0 %v154
    %289 = vmatpush.xpose.msra.mxu0 %v151
    %290 = vmatpush.xpose.msra.mxu0 %v148
    %291 = vmatpush.xpose.msra.mxu0 %v145
    %292 = vmatpush.xpose.msra.mxu0 %v142
    %293 = vmatpush.xpose.msra.mxu0 %v139
    %294 = vmatpush.xpose.msra.mxu0 %v136
    %295 = vmatpush.xpose.msra.mxu0 %v133
    %296 = vmatpush.xpose.msra.mxu0 %v130
    %297 = vmatpush.xpose.msra.mxu0 %v127
    %298 = vmatpush.xpose.msra.mxu0 %v124
    %299 = vmatpush.xpose.msra.mxu0 %v121
    %300 = vmatpush.xpose.msra.mxu0 %v118
    %301 = vmatpush.xpose.msra.mxu0 %v115
    %302 = vmatpush.xpose.msra.mxu0 %v112
    %303 = vmatmul.f32.gmra.mxu0 %v264
    %v304 = vpop.f32.mrf.mxu0
    %v305 = vadd.f32 0.0, %v304
    %306 = vmatmul.f32.gmra.mxu0 %v267
    %v307 = vpop.f32.mrf.mxu0
    %v308 = vadd.f32 0.0, %v307
    %309 = vmatmul.f32.gmra.mxu0 %v270
    %v310 = vpop.f32.mrf.mxu0
    %v311 = vadd.f32 0.0, %v310
    %312 = vmatmul.f32.gmra.mxu0 %v273
    %v313 = vpop.f32.mrf.mxu0
    %v314 = vadd.f32 0.0, %v313
    %315 = vmatmul.f32.gmra.mxu0 %v276
    %v316 = vpop.f32.mrf.mxu0
    %v317 = vadd.f32 0.0, %v316
    %318 = vmatmul.f32.gmra.mxu0 %v279
    %v319 = vpop.f32.mrf.mxu0
    %v320 = vadd.f32 0.0, %v319
    %321 = vmatmul.f32.gmra.mxu0 %v282
    %v322 = vpop.f32.mrf.mxu0
    %v323 = vadd.f32 0.0, %v322
    %324 = vmatmul.f32.gmra.mxu0 %v285
    %v325 = vpop.f32.mrf.mxu0
    %v326 = vadd.f32 0.0, %v325
    %327 = vdwg.mxu0
    %v328 = vadd.f32 %v305, %v308
    %v329 = vadd.f32 %v328, %v311
    %v330 = vadd.f32 %v329, %v314
    %v331 = vadd.f32 %v330, %v317
    %v332 = vadd.f32 %v331, %v320
    %v333 = vadd.f32 %v332, %v323
    %v334 = vadd.f32 %v333, %v326
    %v335 = vrot.slane %v334, 4
    %v336 = vadd.f32 %v334, %v335
    %v337 = vrot.slane %v336, 2
    %v338 = vadd.f32 %v336, %v337
    %v339 = vrot.slane %v338, 1
    %v340 = vadd.f32 %v338, %v339
    %v341 = vmax.f32 %v305, %v317
    %v342 = vmax.f32 %v308, %v320
    %v343 = vmax.f32 %v311, %v323
    %v344 = vmax.f32 %v314, %v326
    %v345 = vmax.f32 %v341, %v342
    %v346 = vmax.f32 %v343, %v344
    %v347 = vmax.f32 %v345, %v346
    %v348 = vrot.slane %v347, 4
    %v349 = vmax.f32 %v347, %v348
    %v350 = vrot.slane %v349, 2
    %v351 = vmax.f32 %v349, %v350
    %v352 = vrot.slane %v351, 1
    %v353 = vmax.f32 %v351, %v352
    %s354 = scalar_lea.vmem [#allocation4], 64
    %v355 = vld [vmem:[%s354] sm:$0xff]
    %v356 = vld [vmem:[%s354 + $0x8] sm:$0xff]
    %v357 = vld [vmem:[%s354 + $0x10] sm:$0xff]
    %v358 = vld [vmem:[%s354 + $0x18] sm:$0xff]
    %359 = vxpose.xlu0.b32.start [1/16] %v355, 128
    %360 = vxpose.xlu0.b32.cont [2/16] %v356, 128
    %361 = vxpose.xlu0.b32.cont [3/16] %v357, 128
    %362 = vxpose.xlu0.b32.cont [4/16] %v358, 128
    %363 = vxpose.xlu0.b32.cont [5/16] 0.0, 128
    %364 = vxpose.xlu0.b32.cont [6/16] 0.0, 128
    %365 = vxpose.xlu0.b32.cont [7/16] 0.0, 128
    %366 = vxpose.xlu0.b32.cont [8/16] 0.0, 128
    %367 = vxpose.xlu0.b32.cont [9/16] 0.0, 128
    %368 = vxpose.xlu0.b32.cont [10/16] 0.0, 128
    %369 = vxpose.xlu0.b32.cont [11/16] 0.0, 128
    %370 = vxpose.xlu0.b32.cont [12/16] 0.0, 128
    %371 = vxpose.xlu0.b32.cont [13/16] 0.0, 128
    %372 = vxpose.xlu0.b32.cont [14/16] 0.0, 128
    %373 = vxpose.xlu0.b32.cont [15/16] 0.0, 128
    %374 = vxpose.xlu0.b32.end [16/16] 0.0, 128
    %v375 = vpop.trf.xlu0
    %v376 = vpop.trf.xlu0
    %v377 = vpop.trf.xlu0
    %v378 = vpop.trf.xlu0
    %v379 = vpop.trf.xlu0
    %v380 = vpop.trf.xlu0
    %v381 = vpop.trf.xlu0
    %v382 = vpop.trf.xlu0
    %v383 = vpop.trf.xlu0
    %v384 = vpop.trf.xlu0
    %v385 = vpop.trf.xlu0
    %v386 = vpop.trf.xlu0
    %v387 = vpop.trf.xlu0
    %v388 = vpop.trf.xlu0
    %v389 = vpop.trf.xlu0
    %v390 = vpop.trf.xlu0
    %v392 = vsel %vm86, %v375, 0
    %v395 = vsel %vm86, %v376, 0
    %v398 = vsel %vm86, %v377, 0
    %v401 = vsel %vm86, %v378, 0
    %v404 = vsel %vm86, %v379, 0
    %v407 = vsel %vm86, %v380, 0
    %v410 = vsel %vm86, %v381, 0
    %v413 = vsel %vm86, %v382, 0
    %415 = vmatpush.xpose.msra.mxu0 %v157
    %416 = vmatpush.xpose.msra.mxu0 %v154
    %417 = vmatpush.xpose.msra.mxu0 %v151
    %418 = vmatpush.xpose.msra.mxu0 %v148
    %419 = vmatpush.xpose.msra.mxu0 %v145
    %420 = vmatpush.xpose.msra.mxu0 %v142
    %421 = vmatpush.xpose.msra.mxu0 %v139
    %422 = vmatpush.xpose.msra.mxu0 %v136
    %423 = vmatpush.xpose.msra.mxu0 %v133
    %424 = vmatpush.xpose.msra.mxu0 %v130
    %425 = vmatpush.xpose.msra.mxu0 %v127
    %426 = vmatpush.xpose.msra.mxu0 %v124
    %427 = vmatpush.xpose.msra.mxu0 %v121
    %428 = vmatpush.xpose.msra.mxu0 %v118
    %429 = vmatpush.xpose.msra.mxu0 %v115
    %430 = vmatpush.xpose.msra.mxu0 %v112
    %431 = vmatmul.f32.gmra.mxu0 %v392
    %v432 = vpop.f32.mrf.mxu0
    %v433 = vadd.f32 0.0, %v432
    %434 = vmatmul.f32.gmra.mxu0 %v395
    %v435 = vpop.f32.mrf.mxu0
    %v436 = vadd.f32 0.0, %v435
    %437 = vmatmul.f32.gmra.mxu0 %v398
    %v438 = vpop.f32.mrf.mxu0
    %v439 = vadd.f32 0.0, %v438
    %440 = vmatmul.f32.gmra.mxu0 %v401
    %v441 = vpop.f32.mrf.mxu0
    %v442 = vadd.f32 0.0, %v441
    %443 = vmatmul.f32.gmra.mxu0 %v404
    %v444 = vpop.f32.mrf.mxu0
    %v445 = vadd.f32 0.0, %v444
    %446 = vmatmul.f32.gmra.mxu0 %v407
    %v447 = vpop.f32.mrf.mxu0
    %v448 = vadd.f32 0.0, %v447
    %449 = vmatmul.f32.gmra.mxu0 %v410
    %v450 = vpop.f32.mrf.mxu0
    %v451 = vadd.f32 0.0, %v450
    %452 = vmatmul.f32.gmra.mxu0 %v413
    %v453 = vpop.f32.mrf.mxu0
    %v454 = vadd.f32 0.0, %v453
    %455 = vdwg.mxu0
    %v456 = vadd.f32 %v433, %v436
    %v457 = vadd.f32 %v456, %v439
    %v458 = vadd.f32 %v457, %v442
    %v459 = vadd.f32 %v458, %v445
    %v460 = vadd.f32 %v459, %v448
    %v461 = vadd.f32 %v460, %v451
    %v462 = vadd.f32 %v461, %v454
    %v463 = vrot.slane %v462, 4
    %v464 = vadd.f32 %v462, %v463
    %v465 = vrot.slane %v464, 2
    %v466 = vadd.f32 %v464, %v465
    %v467 = vrot.slane %v466, 1
    %v468 = vadd.f32 %v466, %v467
    %v469 = vmax.f32 %v433, %v445
    %v470 = vmax.f32 %v436, %v448
    %v471 = vmax.f32 %v439, %v451
    %v472 = vmax.f32 %v442, %v454
    %v473 = vmax.f32 %v469, %v470
    %v474 = vmax.f32 %v471, %v472
    %v475 = vmax.f32 %v473, %v474
    %v476 = vrot.slane %v475, 4
    %v477 = vmax.f32 %v475, %v476
    %v478 = vrot.slane %v477, 2
    %v479 = vmax.f32 %v477, %v478
    %v480 = vrot.slane %v479, 1
    %v481 = vmax.f32 %v479, %v480
    %s482 = scalar_lea.vmem [#allocation4], 96
    %v483 = vld [vmem:[%s482] sm:$0xff]
    %v484 = vld [vmem:[%s482 + $0x8] sm:$0xff]
    %v485 = vld [vmem:[%s482 + $0x10] sm:$0xff]
    %v486 = vld [vmem:[%s482 + $0x18] sm:$0xff]
    %487 = vxpose.xlu0.b32.start [1/16] %v483, 128
    %488 = vxpose.xlu0.b32.cont [2/16] %v484, 128
    %489 = vxpose.xlu0.b32.cont [3/16] %v485, 128
    %490 = vxpose.xlu0.b32.cont [4/16] %v486, 128
    %491 = vxpose.xlu0.b32.cont [5/16] 0.0, 128
    %492 = vxpose.xlu0.b32.cont [6/16] 0.0, 128
    %493 = vxpose.xlu0.b32.cont [7/16] 0.0, 128
    %494 = vxpose.xlu0.b32.cont [8/16] 0.0, 128
    %495 = vxpose.xlu0.b32.cont [9/16] 0.0, 128
    %496 = vxpose.xlu0.b32.cont [10/16] 0.0, 128
    %497 = vxpose.xlu0.b32.cont [11/16] 0.0, 128
    %498 = vxpose.xlu0.b32.cont [12/16] 0.0, 128
    %499 = vxpose.xlu0.b32.cont [13/16] 0.0, 128
    %500 = vxpose.xlu0.b32.cont [14/16] 0.0, 128
    %501 = vxpose.xlu0.b32.cont [15/16] 0.0, 128
    %502 = vxpose.xlu0.b32.end [16/16] 0.0, 128
    %v503 = vpop.trf.xlu0
    %v504 = vpop.trf.xlu0
    %v505 = vpop.trf.xlu0
    %v506 = vpop.trf.xlu0
    %v507 = vpop.trf.xlu0
    %v508 = vpop.trf.xlu0
    %v509 = vpop.trf.xlu0
    %v510 = vpop.trf.xlu0
    %v511 = vpop.trf.xlu0
    %v512 = vpop.trf.xlu0
    %v513 = vpop.trf.xlu0
    %v514 = vpop.trf.xlu0
    %v515 = vpop.trf.xlu0
    %v516 = vpop.trf.xlu0
    %v517 = vpop.trf.xlu0
    %v518 = vpop.trf.xlu0
    %v520 = vsel %vm86, %v503, 0
    %v523 = vsel %vm86, %v504, 0
    %v526 = vsel %vm86, %v505, 0
    %v529 = vsel %vm86, %v506, 0
    %v532 = vsel %vm86, %v507, 0
    %v535 = vsel %vm86, %v508, 0
    %v538 = vsel %vm86, %v509, 0
    %v541 = vsel %vm86, %v510, 0
    %543 = vmatpush.xpose.msra.mxu0 %v157
    %544 = vmatpush.xpose.msra.mxu0 %v154
    %545 = vmatpush.xpose.msra.mxu0 %v151
    %546 = vmatpush.xpose.msra.mxu0 %v148
    %547 = vmatpush.xpose.msra.mxu0 %v145
    %548 = vmatpush.xpose.msra.mxu0 %v142
    %549 = vmatpush.xpose.msra.mxu0 %v139
    %550 = vmatpush.xpose.msra.mxu0 %v136
    %551 = vmatpush.xpose.msra.mxu0 %v133
    %552 = vmatpush.xpose.msra.mxu0 %v130
    %553 = vmatpush.xpose.msra.mxu0 %v127
    %554 = vmatpush.xpose.msra.mxu0 %v124
    %555 = vmatpush.xpose.msra.mxu0 %v121
    %556 = vmatpush.xpose.msra.mxu0 %v118
    %557 = vmatpush.xpose.msra.mxu0 %v115
    %558 = vmatpush.xpose.msra.mxu0 %v112
    %559 = vmatmul.f32.gmra.mxu0 %v520
    %v560 = vpop.f32.mrf.mxu0
    %v561 = vadd.f32 0.0, %v560
    %562 = vmatmul.f32.gmra.mxu0 %v523
    %v563 = vpop.f32.mrf.mxu0
    %v564 = vadd.f32 0.0, %v563
    %565 = vmatmul.f32.gmra.mxu0 %v526
    %v566 = vpop.f32.mrf.mxu0
    %v567 = vadd.f32 0.0, %v566
    %568 = vmatmul.f32.gmra.mxu0 %v529
    %v569 = vpop.f32.mrf.mxu0
    %v570 = vadd.f32 0.0, %v569
    %571 = vmatmul.f32.gmra.mxu0 %v532
    %v572 = vpop.f32.mrf.mxu0
    %v573 = vadd.f32 0.0, %v572
    %574 = vmatmul.f32.gmra.mxu0 %v535
    %v575 = vpop.f32.mrf.mxu0
    %v576 = vadd.f32 0.0, %v575
    %577 = vmatmul.f32.gmra.mxu0 %v538
    %v578 = vpop.f32.mrf.mxu0
    %v579 = vadd.f32 0.0, %v578
    %580 = vmatmul.f32.gmra.mxu0 %v541
    %v581 = vpop.f32.mrf.mxu0
    %v582 = vadd.f32 0.0, %v581
    %583 = vdwg.mxu0
    %v584 = vadd.f32 %v561, %v564
    %v585 = vadd.f32 %v584, %v567
    %v586 = vadd.f32 %v585, %v570
    %v587 = vadd.f32 %v586, %v573
    %v588 = vadd.f32 %v587, %v576
    %v589 = vadd.f32 %v588, %v579
    %v590 = vadd.f32 %v589, %v582
    %v591 = vrot.slane %v590, 4
    %v592 = vadd.f32 %v590, %v591
    %v593 = vrot.slane %v592, 2
    %v594 = vadd.f32 %v592, %v593
    %v595 = vrot.slane %v594, 1
    %v596 = vadd.f32 %v594, %v595
    %v597 = vmax.f32 %v561, %v573
    %v598 = vmax.f32 %v564, %v576
    %v599 = vmax.f32 %v567, %v579
    %v600 = vmax.f32 %v570, %v582
    %v601 = vmax.f32 %v597, %v598
    %v602 = vmax.f32 %v599, %v600
    %v603 = vmax.f32 %v601, %v602
    %v604 = vrot.slane %v603, 4
    %v605 = vmax.f32 %v603, %v604
    %v606 = vrot.slane %v605, 2
    %v607 = vmax.f32 %v605, %v606
    %v608 = vrot.slane %v607, 1
    %v609 = vmax.f32 %v607, %v608
    %s610 = scalar_lea.vmem [#allocation4], 128
    %v611 = vld [vmem:[%s610] sm:$0xff]
    %v612 = vld [vmem:[%s610 + $0x8] sm:$0xff]
    %v613 = vld [vmem:[%s610 + $0x10] sm:$0xff]
    %v614 = vld [vmem:[%s610 + $0x18] sm:$0xff]
    %615 = vxpose.xlu0.b32.start [1/16] %v611, 128
    %616 = vxpose.xlu0.b32.cont [2/16] %v612, 128
    %617 = vxpose.xlu0.b32.cont [3/16] %v613, 128
    %618 = vxpose.xlu0.b32.cont [4/16] %v614, 128
    %619 = vxpose.xlu0.b32.cont [5/16] 0.0, 128
    %620 = vxpose.xlu0.b32.cont [6/16] 0.0, 128
    %621 = vxpose.xlu0.b32.cont [7/16] 0.0, 128
    %622 = vxpose.xlu0.b32.cont [8/16] 0.0, 128
    %623 = vxpose.xlu0.b32.cont [9/16] 0.0, 128
    %624 = vxpose.xlu0.b32.cont [10/16] 0.0, 128
    %625 = vxpose.xlu0.b32.cont [11/16] 0.0, 128
    %626 = vxpose.xlu0.b32.cont [12/16] 0.0, 128
    %627 = vxpose.xlu0.b32.cont [13/16] 0.0, 128
    %628 = vxpose.xlu0.b32.cont [14/16] 0.0, 128
    %629 = vxpose.xlu0.b32.cont [15/16] 0.0, 128
    %630 = vxpose.xlu0.b32.end [16/16] 0.0, 128
    %v631 = vpop.trf.xlu0
    %v632 = vpop.trf.xlu0
    %v633 = vpop.trf.xlu0
    %v634 = vpop.trf.xlu0
    %v635 = vpop.trf.xlu0
    %v636 = vpop.trf.xlu0
    %v637 = vpop.trf.xlu0
    %v638 = vpop.trf.xlu0
    %v639 = vpop.trf.xlu0
    %v640 = vpop.trf.xlu0
    %v641 = vpop.trf.xlu0
    %v642 = vpop.trf.xlu0
    %v643 = vpop.trf.xlu0
    %v644 = vpop.trf.xlu0
    %v645 = vpop.trf.xlu0
    %v646 = vpop.trf.xlu0
    %v648 = vsel %vm86, %v631, 0
    %v651 = vsel %vm86, %v632, 0
    %v654 = vsel %vm86, %v633, 0
    %v657 = vsel %vm86, %v634, 0
    %v660 = vsel %vm86, %v635, 0
    %v663 = vsel %vm86, %v636, 0
    %v666 = vsel %vm86, %v637, 0
    %v669 = vsel %vm86, %v638, 0
    %671 = vmatpush.xpose.msra.mxu0 %v157
    %672 = vmatpush.xpose.msra.mxu0 %v154
    %673 = vmatpush.xpose.msra.mxu0 %v151
    %674 = vmatpush.xpose.msra.mxu0 %v148
    %675 = vmatpush.xpose.msra.mxu0 %v145
    %676 = vmatpush.xpose.msra.mxu0 %v142
    %677 = vmatpush.xpose.msra.mxu0 %v139
    %678 = vmatpush.xpose.msra.mxu0 %v136
    %679 = vmatpush.xpose.msra.mxu0 %v133
    %680 = vmatpush.xpose.msra.mxu0 %v130
    %681 = vmatpush.xpose.msra.mxu0 %v127
    %682 = vmatpush.xpose.msra.mxu0 %v124
    %683 = vmatpush.xpose.msra.mxu0 %v121
    %684 = vmatpush.xpose.msra.mxu0 %v118
    %685 = vmatpush.xpose.msra.mxu0 %v115
    %686 = vmatpush.xpose.msra.mxu0 %v112
    %687 = vmatmul.f32.gmra.mxu0 %v648
    %v688 = vpop.f32.mrf.mxu0
    %v689 = vadd.f32 0.0, %v688
    %690 = vmatmul.f32.gmra.mxu0 %v651
    %v691 = vpop.f32.mrf.mxu0
    %v692 = vadd.f32 0.0, %v691
    %693 = vmatmul.f32.gmra.mxu0 %v654
    %v694 = vpop.f32.mrf.mxu0
    %v695 = vadd.f32 0.0, %v694
    %696 = vmatmul.f32.gmra.mxu0 %v657
    %v697 = vpop.f32.mrf.mxu0
    %v698 = vadd.f32 0.0, %v697
    %699 = vmatmul.f32.gmra.mxu0 %v660
    %v700 = vpop.f32.mrf.mxu0
    %v701 = vadd.f32 0.0, %v700
    %702 = vmatmul.f32.gmra.mxu0 %v663
    %v703 = vpop.f32.mrf.mxu0
    %v704 = vadd.f32 0.0, %v703
    %705 = vmatmul.f32.gmra.mxu0 %v666
    %v706 = vpop.f32.mrf.mxu0
    %v707 = vadd.f32 0.0, %v706
    %708 = vmatmul.f32.gmra.mxu0 %v669
    %v709 = vpop.f32.mrf.mxu0
    %v710 = vadd.f32 0.0, %v709
    %711 = vdwg.mxu0
    %v712 = vadd.f32 %v689, %v692
    %v713 = vadd.f32 %v712, %v695
    %v714 = vadd.f32 %v713, %v698
    %v715 = vadd.f32 %v714, %v701
    %v716 = vadd.f32 %v715, %v704
    %v717 = vadd.f32 %v716, %v707
    %v718 = vadd.f32 %v717, %v710
    %v719 = vrot.slane %v718, 4
    %v720 = vadd.f32 %v718, %v719
    %v721 = vrot.slane %v720, 2
    %v722 = vadd.f32 %v720, %v721
    %v723 = vrot.slane %v722, 1
    %v724 = vadd.f32 %v722, %v723
    %v725 = vmax.f32 %v689, %v701
    %v726 = vmax.f32 %v692, %v704
    %v727 = vmax.f32 %v695, %v707
    %v728 = vmax.f32 %v698, %v710
    %v729 = vmax.f32 %v725, %v726
    %v730 = vmax.f32 %v727, %v728
    %v731 = vmax.f32 %v729, %v730
    %v732 = vrot.slane %v731, 4
    %v733 = vmax.f32 %v731, %v732
    %v734 = vrot.slane %v733, 2
    %v735 = vmax.f32 %v733, %v734
    %v736 = vrot.slane %v735, 1
    %v737 = vmax.f32 %v735, %v736
    %s738 = scalar_lea.vmem [#allocation4], 160
    %v739 = vld [vmem:[%s738] sm:$0xff]
    %v740 = vld [vmem:[%s738 + $0x8] sm:$0xff]
    %v741 = vld [vmem:[%s738 + $0x10] sm:$0xff]
    %v742 = vld [vmem:[%s738 + $0x18] sm:$0xff]
    %743 = vxpose.xlu0.b32.start [1/16] %v739, 128
    %744 = vxpose.xlu0.b32.cont [2/16] %v740, 128
    %745 = vxpose.xlu0.b32.cont [3/16] %v741, 128
    %746 = vxpose.xlu0.b32.cont [4/16] %v742, 128
    %747 = vxpose.xlu0.b32.cont [5/16] 0.0, 128
    %748 = vxpose.xlu0.b32.cont [6/16] 0.0, 128
    %749 = vxpose.xlu0.b32.cont [7/16] 0.0, 128
    %750 = vxpose.xlu0.b32.cont [8/16] 0.0, 128
    %751 = vxpose.xlu0.b32.cont [9/16] 0.0, 128
    %752 = vxpose.xlu0.b32.cont [10/16] 0.0, 128
    %753 = vxpose.xlu0.b32.cont [11/16] 0.0, 128
    %754 = vxpose.xlu0.b32.cont [12/16] 0.0, 128
    %755 = vxpose.xlu0.b32.cont [13/16] 0.0, 128
    %756 = vxpose.xlu0.b32.cont [14/16] 0.0, 128
    %757 = vxpose.xlu0.b32.cont [15/16] 0.0, 128
    %758 = vxpose.xlu0.b32.end [16/16] 0.0, 128
    %v759 = vpop.trf.xlu0
    %v760 = vpop.trf.xlu0
    %v761 = vpop.trf.xlu0
    %v762 = vpop.trf.xlu0
    %v763 = vpop.trf.xlu0
    %v764 = vpop.trf.xlu0
    %v765 = vpop.trf.xlu0
    %v766 = vpop.trf.xlu0
    %v767 = vpop.trf.xlu0
    %v768 = vpop.trf.xlu0
    %v769 = vpop.trf.xlu0
    %v770 = vpop.trf.xlu0
    %v771 = vpop.trf.xlu0
    %v772 = vpop.trf.xlu0
    %v773 = vpop.trf.xlu0
    %v774 = vpop.trf.xlu0
    %v776 = vsel %vm86, %v759, 0
    %v779 = vsel %vm86, %v760, 0
    %v782 = vsel %vm86, %v761, 0
    %v785 = vsel %vm86, %v762, 0
    %v788 = vsel %vm86, %v763, 0
    %v791 = vsel %vm86, %v764, 0
    %v794 = vsel %vm86, %v765, 0
    %v797 = vsel %vm86, %v766, 0
    %799 = vmatpush.xpose.msra.mxu0 %v157
    %800 = vmatpush.xpose.msra.mxu0 %v154
    %801 = vmatpush.xpose.msra.mxu0 %v151
    %802 = vmatpush.xpose.msra.mxu0 %v148
    %803 = vmatpush.xpose.msra.mxu0 %v145
    %804 = vmatpush.xpose.msra.mxu0 %v142
    %805 = vmatpush.xpose.msra.mxu0 %v139
    %806 = vmatpush.xpose.msra.mxu0 %v136
    %807 = vmatpush.xpose.msra.mxu0 %v133
    %808 = vmatpush.xpose.msra.mxu0 %v130
    %809 = vmatpush.xpose.msra.mxu0 %v127
    %810 = vmatpush.xpose.msra.mxu0 %v124
    %811 = vmatpush.xpose.msra.mxu0 %v121
    %812 = vmatpush.xpose.msra.mxu0 %v118
    %813 = vmatpush.xpose.msra.mxu0 %v115
    %814 = vmatpush.xpose.msra.mxu0 %v112
    %815 = vmatmul.f32.gmra.mxu0 %v776
    %v816 = vpop.f32.mrf.mxu0
    %v817 = vadd.f32 0.0, %v816
    %818 = vmatmul.f32.gmra.mxu0 %v779
    %v819 = vpop.f32.mrf.mxu0
    %v820 = vadd.f32 0.0, %v819
    %821 = vmatmul.f32.gmra.mxu0 %v782
    %v822 = vpop.f32.mrf.mxu0
    %v823 = vadd.f32 0.0, %v822
    %824 = vmatmul.f32.gmra.mxu0 %v785
    %v825 = vpop.f32.mrf.mxu0
    %v826 = vadd.f32 0.0, %v825
    %827 = vmatmul.f32.gmra.mxu0 %v788
    %v828 = vpop.f32.mrf.mxu0
    %v829 = vadd.f32 0.0, %v828
    %830 = vmatmul.f32.gmra.mxu0 %v791
    %v831 = vpop.f32.mrf.mxu0
    %v832 = vadd.f32 0.0, %v831
    %833 = vmatmul.f32.gmra.mxu0 %v794
    %v834 = vpop.f32.mrf.mxu0
    %v835 = vadd.f32 0.0, %v834
    %836 = vmatmul.f32.gmra.mxu0 %v797
    %v837 = vpop.f32.mrf.mxu0
    %v838 = vadd.f32 0.0, %v837
    %839 = vdwg.mxu0
    %v840 = vadd.f32 %v817, %v820
    %v841 = vadd.f32 %v840, %v823
    %v842 = vadd.f32 %v841, %v826
    %v843 = vadd.f32 %v842, %v829
    %v844 = vadd.f32 %v843, %v832
    %v845 = vadd.f32 %v844, %v835
    %v846 = vadd.f32 %v845, %v838
    %v847 = vrot.slane %v846, 4
    %v848 = vadd.f32 %v846, %v847
    %v849 = vrot.slane %v848, 2
    %v850 = vadd.f32 %v848, %v849
    %v851 = vrot.slane %v850, 1
    %v852 = vadd.f32 %v850, %v851
    %v853 = vmax.f32 %v817, %v829
    %v854 = vmax.f32 %v820, %v832
    %v855 = vmax.f32 %v823, %v835
    %v856 = vmax.f32 %v826, %v838
    %v857 = vmax.f32 %v853, %v854
    %v858 = vmax.f32 %v855, %v856
    %v859 = vmax.f32 %v857, %v858
    %v860 = vrot.slane %v859, 4
    %v861 = vmax.f32 %v859, %v860
    %v862 = vrot.slane %v861, 2
    %v863 = vmax.f32 %v861, %v862
    %v864 = vrot.slane %v863, 1
    %v865 = vmax.f32 %v863, %v864
    %s866 = scalar_lea.vmem [#allocation4], 192
    %v867 = vld [vmem:[%s866] sm:$0xff]
    %v868 = vld [vmem:[%s866 + $0x8] sm:$0xff]
    %v869 = vld [vmem:[%s866 + $0x10] sm:$0xff]
    %v870 = vld [vmem:[%s866 + $0x18] sm:$0xff]
    %871 = vxpose.xlu0.b32.start [1/16] %v867, 128
    %872 = vxpose.xlu0.b32.cont [2/16] %v868, 128
    %873 = vxpose.xlu0.b32.cont [3/16] %v869, 128
    %874 = vxpose.xlu0.b32.cont [4/16] %v870, 128
    %875 = vxpose.xlu0.b32.cont [5/16] 0.0, 128
    %876 = vxpose.xlu0.b32.cont [6/16] 0.0, 128
    %877 = vxpose.xlu0.b32.cont [7/16] 0.0, 128
    %878 = vxpose.xlu0.b32.cont [8/16] 0.0, 128
    %879 = vxpose.xlu0.b32.cont [9/16] 0.0, 128
    %880 = vxpose.xlu0.b32.cont [10/16] 0.0, 128
    %881 = vxpose.xlu0.b32.cont [11/16] 0.0, 128
    %882 = vxpose.xlu0.b32.cont [12/16] 0.0, 128
    %883 = vxpose.xlu0.b32.cont [13/16] 0.0, 128
    %884 = vxpose.xlu0.b32.cont [14/16] 0.0, 128
    %885 = vxpose.xlu0.b32.cont [15/16] 0.0, 128
    %886 = vxpose.xlu0.b32.end [16/16] 0.0, 128
    %v887 = vpop.trf.xlu0
    %v888 = vpop.trf.xlu0
    %v889 = vpop.trf.xlu0
    %v890 = vpop.trf.xlu0
    %v891 = vpop.trf.xlu0
    %v892 = vpop.trf.xlu0
    %v893 = vpop.trf.xlu0
    %v894 = vpop.trf.xlu0
    %v895 = vpop.trf.xlu0
    %v896 = vpop.trf.xlu0
    %v897 = vpop.trf.xlu0
    %v898 = vpop.trf.xlu0
    %v899 = vpop.trf.xlu0
    %v900 = vpop.trf.xlu0
    %v901 = vpop.trf.xlu0
    %v902 = vpop.trf.xlu0
    %v904 = vsel %vm86, %v887, 0
    %v907 = vsel %vm86, %v888, 0
    %v910 = vsel %vm86, %v889, 0
    %v913 = vsel %vm86, %v890, 0
    %v916 = vsel %vm86, %v891, 0
    %v919 = vsel %vm86, %v892, 0
    %v922 = vsel %vm86, %v893, 0
    %v925 = vsel %vm86, %v894, 0
    %927 = vmatpush.xpose.msra.mxu0 %v157
    %928 = vmatpush.xpose.msra.mxu0 %v154
    %929 = vmatpush.xpose.msra.mxu0 %v151
    %930 = vmatpush.xpose.msra.mxu0 %v148
    %931 = vmatpush.xpose.msra.mxu0 %v145
    %932 = vmatpush.xpose.msra.mxu0 %v142
    %933 = vmatpush.xpose.msra.mxu0 %v139
    %934 = vmatpush.xpose.msra.mxu0 %v136
    %935 = vmatpush.xpose.msra.mxu0 %v133
    %936 = vmatpush.xpose.msra.mxu0 %v130
    %937 = vmatpush.xpose.msra.mxu0 %v127
    %938 = vmatpush.xpose.msra.mxu0 %v124
    %939 = vmatpush.xpose.msra.mxu0 %v121
    %940 = vmatpush.xpose.msra.mxu0 %v118
    %941 = vmatpush.xpose.msra.mxu0 %v115
    %942 = vmatpush.xpose.msra.mxu0 %v112
    %943 = vmatmul.f32.gmra.mxu0 %v904
    %v944 = vpop.f32.mrf.mxu0
    %v945 = vadd.f32 0.0, %v944
    %946 = vmatmul.f32.gmra.mxu0 %v907
    %v947 = vpop.f32.mrf.mxu0
    %v948 = vadd.f32 0.0, %v947
    %949 = vmatmul.f32.gmra.mxu0 %v910
    %v950 = vpop.f32.mrf.mxu0
    %v951 = vadd.f32 0.0, %v950
    %952 = vmatmul.f32.gmra.mxu0 %v913
    %v953 = vpop.f32.mrf.mxu0
    %v954 = vadd.f32 0.0, %v953
    %955 = vmatmul.f32.gmra.mxu0 %v916
    %v956 = vpop.f32.mrf.mxu0
    %v957 = vadd.f32 0.0, %v956
    %958 = vmatmul.f32.gmra.mxu0 %v919
    %v959 = vpop.f32.mrf.mxu0
    %v960 = vadd.f32 0.0, %v959
    %961 = vmatmul.f32.gmra.mxu0 %v922
    %v962 = vpop.f32.mrf.mxu0
    %v963 = vadd.f32 0.0, %v962
    %964 = vmatmul.f32.gmra.mxu0 %v925
    %v965 = vpop.f32.mrf.mxu0
    %v966 = vadd.f32 0.0, %v965
    %967 = vdwg.mxu0
    %v968 = vadd.f32 %v945, %v948
    %v969 = vadd.f32 %v968, %v951
    %v970 = vadd.f32 %v969, %v954
    %v971 = vadd.f32 %v970, %v957
    %v972 = vadd.f32 %v971, %v960
    %v973 = vadd.f32 %v972, %v963
    %v974 = vadd.f32 %v973, %v966
    %v975 = vrot.slane %v974, 4
    %v976 = vadd.f32 %v974, %v975
    %v977 = vrot.slane %v976, 2
    %v978 = vadd.f32 %v976, %v977
    %v979 = vrot.slane %v978, 1
    %v980 = vadd.f32 %v978, %v979
    %v981 = vmax.f32 %v945, %v957
    %v982 = vmax.f32 %v948, %v960
    %v983 = vmax.f32 %v951, %v963
    %v984 = vmax.f32 %v954, %v966
    %v985 = vmax.f32 %v981, %v982
    %v986 = vmax.f32 %v983, %v984
    %v987 = vmax.f32 %v985, %v986
    %v988 = vrot.slane %v987, 4
    %v989 = vmax.f32 %v987, %v988
    %v990 = vrot.slane %v989, 2
    %v991 = vmax.f32 %v989, %v990
    %v992 = vrot.slane %v991, 1
    %v993 = vmax.f32 %v991, %v992
    %s994 = scalar_lea.vmem [#allocation4], 224
    %v995 = vld [vmem:[%s994] sm:$0xff]
    %v996 = vld [vmem:[%s994 + $0x8] sm:$0xff]
    %v997 = vld [vmem:[%s994 + $0x10] sm:$0xff]
    %v998 = vld [vmem:[%s994 + $0x18] sm:$0xff]
    %999 = vxpose.xlu0.b32.start [1/16] %v995, 128
    %1000 = vxpose.xlu0.b32.cont [2/16] %v996, 128
    %1001 = vxpose.xlu0.b32.cont [3/16] %v997, 128
    %1002 = vxpose.xlu0.b32.cont [4/16] %v998, 128
    %1003 = vxpose.xlu0.b32.cont [5/16] 0.0, 128
    %1004 = vxpose.xlu0.b32.cont [6/16] 0.0, 128
    %1005 = vxpose.xlu0.b32.cont [7/16] 0.0, 128
    %1006 = vxpose.xlu0.b32.cont [8/16] 0.0, 128
    %1007 = vxpose.xlu0.b32.cont [9/16] 0.0, 128
    %1008 = vxpose.xlu0.b32.cont [10/16] 0.0, 128
    %1009 = vxpose.xlu0.b32.cont [11/16] 0.0, 128
    %1010 = vxpose.xlu0.b32.cont [12/16] 0.0, 128
    %1011 = vxpose.xlu0.b32.cont [13/16] 0.0, 128
    %1012 = vxpose.xlu0.b32.cont [14/16] 0.0, 128
    %1013 = vxpose.xlu0.b32.cont [15/16] 0.0, 128
    %1014 = vxpose.xlu0.b32.end [16/16] 0.0, 128
    %v1015 = vpop.trf.xlu0
    %v1016 = vpop.trf.xlu0
    %v1017 = vpop.trf.xlu0
    %v1018 = vpop.trf.xlu0
    %v1019 = vpop.trf.xlu0
    %v1020 = vpop.trf.xlu0
    %v1021 = vpop.trf.xlu0
    %v1022 = vpop.trf.xlu0
    %v1023 = vpop.trf.xlu0
    %v1024 = vpop.trf.xlu0
    %v1025 = vpop.trf.xlu0
    %v1026 = vpop.trf.xlu0
    %v1027 = vpop.trf.xlu0
    %v1028 = vpop.trf.xlu0
    %v1029 = vpop.trf.xlu0
    %v1030 = vpop.trf.xlu0
    %v1032 = vsel %vm86, %v1015, 0
    %v1035 = vsel %vm86, %v1016, 0
    %v1038 = vsel %vm86, %v1017, 0
    %v1041 = vsel %vm86, %v1018, 0
    %v1044 = vsel %vm86, %v1019, 0
    %v1047 = vsel %vm86, %v1020, 0
    %v1050 = vsel %vm86, %v1021, 0
    %v1053 = vsel %vm86, %v1022, 0
    %1055 = vmatpush.xpose.msra.mxu0 %v157
    %1056 = vmatpush.xpose.msra.mxu0 %v154
    %1057 = vmatpush.xpose.msra.mxu0 %v151
    %1058 = vmatpush.xpose.msra.mxu0 %v148
    %1059 = vmatpush.xpose.msra.mxu0 %v145
    %1060 = vmatpush.xpose.msra.mxu0 %v142
    %1061 = vmatpush.xpose.msra.mxu0 %v139
    %1062 = vmatpush.xpose.msra.mxu0 %v136
    %1063 = vmatpush.xpose.msra.mxu0 %v133
    %1064 = vmatpush.xpose.msra.mxu0 %v130
    %1065 = vmatpush.xpose.msra.mxu0 %v127
    %1066 = vmatpush.xpose.msra.mxu0 %v124
    %1067 = vmatpush.xpose.msra.mxu0 %v121
    %1068 = vmatpush.xpose.msra.mxu0 %v118
    %1069 = vmatpush.xpose.msra.mxu0 %v115
    %1070 = vmatpush.xpose.msra.mxu0 %v112
    %1071 = vmatmul.f32.gmra.mxu0 %v1032
    %v1072 = vpop.f32.mrf.mxu0
    %v1073 = vadd.f32 0.0, %v1072
    %1074 = vmatmul.f32.gmra.mxu0 %v1035
    %v1075 = vpop.f32.mrf.mxu0
    %v1076 = vadd.f32 0.0, %v1075
    %1077 = vmatmul.f32.gmra.mxu0 %v1038
    %v1078 = vpop.f32.mrf.mxu0
    %v1079 = vadd.f32 0.0, %v1078
    %1080 = vmatmul.f32.gmra.mxu0 %v1041
    %v1081 = vpop.f32.mrf.mxu0
    %v1082 = vadd.f32 0.0, %v1081
    %1083 = vmatmul.f32.gmra.mxu0 %v1044
    %v1084 = vpop.f32.mrf.mxu0
    %v1085 = vadd.f32 0.0, %v1084
    %1086 = vmatmul.f32.gmra.mxu0 %v1047
    %v1087 = vpop.f32.mrf.mxu0
    %v1088 = vadd.f32 0.0, %v1087
    %1089 = vmatmul.f32.gmra.mxu0 %v1050
    %v1090 = vpop.f32.mrf.mxu0
    %v1091 = vadd.f32 0.0, %v1090
    %1092 = vmatmul.f32.gmra.mxu0 %v1053
    %v1093 = vpop.f32.mrf.mxu0
    %v1094 = vadd.f32 0.0, %v1093
    %1095 = vdwg.mxu0
    %v1096 = vadd.f32 %v1073, %v1076
    %v1097 = vadd.f32 %v1096, %v1079
    %v1098 = vadd.f32 %v1097, %v1082
    %v1099 = vadd.f32 %v1098, %v1085
    %v1100 = vadd.f32 %v1099, %v1088
    %v1101 = vadd.f32 %v1100, %v1091
    %v1102 = vadd.f32 %v1101, %v1094
    %v1103 = vrot.slane %v1102, 4
    %v1104 = vadd.f32 %v1102, %v1103
    %v1105 = vrot.slane %v1104, 2
    %v1106 = vadd.f32 %v1104, %v1105
    %v1107 = vrot.slane %v1106, 1
    %v1108 = vadd.f32 %v1106, %v1107
    %v1109 = vmax.f32 %v1073, %v1085
    %v1110 = vmax.f32 %v1076, %v1088
    %v1111 = vmax.f32 %v1079, %v1091
    %v1112 = vmax.f32 %v1082, %v1094
    %v1113 = vmax.f32 %v1109, %v1110
    %v1114 = vmax.f32 %v1111, %v1112
    %v1115 = vmax.f32 %v1113, %v1114
    %v1116 = vrot.slane %v1115, 4
    %v1117 = vmax.f32 %v1115, %v1116
    %v1118 = vrot.slane %v1117, 2
    %v1119 = vmax.f32 %v1117, %v1118
    %v1120 = vrot.slane %v1119, 1
    %v1121 = vmax.f32 %v1119, %v1120
    %v1122 = vld [vmem:[#allocation2] sm:$0xff]
    %vm1123 = vcmask 1040384
    %v1124 = vsel %vm1123, %v212, %v340
    %vm1125 = vcmask 1041408
    %v1126 = vsel %vm1125, %v1124, %v468
    %vm1127 = vcmask 1042432
    %v1128 = vsel %vm1127, %v1126, %v596
    %vm1129 = vcmask 1043456
    %v1130 = vsel %vm1129, %v1128, %v724
    %vm1131 = vcmask 1044480
    %v1132 = vsel %vm1131, %v1130, %v852
    %vm1133 = vcmask 1045504
    %v1134 = vsel %vm1133, %v1132, %v980
    %vm1135 = vcmask 1046528
    %v1136 = vsel %vm1135, %v1134, %v1108
    %v1137 = vadd.f32 %v1122, %v1136
    %1138 = vst [vmem:[#allocation2] sm:$0xff] %v1137
    %v1139 = vld [vmem:[#allocation3] sm:$0xff]
    %v1140 = vsel %vm1123, %v225, %v353
    %v1141 = vsel %vm1125, %v1140, %v481
    %v1142 = vsel %vm1127, %v1141, %v609
    %v1143 = vsel %vm1129, %v1142, %v737
    %v1144 = vsel %vm1131, %v1143, %v865
    %v1145 = vsel %vm1133, %v1144, %v993
    %v1146 = vsel %vm1135, %v1145, %v1121
    %v1147 = vmax.f32 %v1139, %v1146
    %1148 = vst [vmem:[#allocation3] sm:$0xff] %v1147
    // Predicated region
    $region18: #{tpu_custom_call.1} parent=1 // pred_check
      %p1149 = pneg %p28
    $region19: #{tpu_custom_call.1} parent=1 // pred_check_branch
      %1151 = sbr.rel (%p1149) target = $region21
    $region20: #{tpu_custom_call.1} parent=1 // pred_region
      %v1152 = vld [vmem:[#allocation2] sm:$0xff]
      %v1153 = vmul.f32 %v1152, 0.015625
      %v1154 = vld [vmem:[#allocation3] sm:$0xff]
      %v1155 = vmul.f32 %v1154, 0.2
      %v1156 = vadd.f32 %v1153, %v1155
      %1157 = vst [vmem:[#allocation7] sm:$0xff] %v1156
    $region21: #{tpu_custom_call.1} parent=1 // pred_fallthru
      _
    // Predicated region
    $region22: #{tpu_custom_call.1} parent=1 // pred_check
      _
    $region23: #{tpu_custom_call.1} parent=1 // pred_check_branch
      %1159 = sbr.rel (0) target = $region25
    $region24: #{tpu_custom_call.1} parent=1 // pred_region
      %1161 = vsyncadd [#allocation6], 0
      %s1163 = sshll.u32 [#allocation7], 4
      %s1164 = int_to_ptr.vmem [resolvable:$true] %s1163
      %s1165 = sshll.u32 %s2, 4
      %s1166 = int_to_ptr.hbm [resolvable:$true] %s1165
      %1168 = dma.vmem_to_hbm [thread:$0]  %s1164, 128, %s1166, [#allocation6]
    $region25: #{tpu_custom_call.1} parent=1 // pred_fallthru
      _
    // Predicated region
    $region26: #{tpu_custom_call.1} parent=1 // pred_check
      _
    $region27: #{tpu_custom_call.1} parent=1 // pred_check_branch
      %1170 = sbr.rel (0) target = $region29
    $region28: #{tpu_custom_call.1} parent=1 // pred_region
      %1172 = dma.done [#allocation6], 128
    $region29: #{tpu_custom_call.1} parent=1 // pred_fallthru
      _
    %1173 = vsyncpa [#allocation5], 1
    %1174 = vsyncpa [#allocation6], 1

</llo_original>
